<compile_context>
chip_gen: v5e
topology: v5e:2x2
jax: 0.10.0
libtpu: 0.0.40
codegen_flags: <defaults>
</compile_context>

<pallas_src>
import functools

import jax
import jax.numpy as jnp
from jax.experimental import pallas as pl
from jax.experimental.pallas import tpu as pltpu


def _gelu(x):
    # tanh-approximate GELU (EUP-friendly on TPU).
    # TODO(synk): PyTorch F.gelu defaults to exact erf; tanh approximation used here.
    return jax.nn.gelu(x, approximate=True)


def _round_up(n, m):
    return ((n + m - 1) // m) * m


def _rev_block_kernel(x_ref,
                      w1f_ref, b1f_ref, w2f_ref, b2f_ref,
                      w1g_ref, b1g_ref, w2g_ref, b2g_ref,
                      o_ref, *, d, matmul_dtype):
    # chunk(x, 2, dim=feature) via static lane slices of the same (tm, 2*D) tile.
    x1 = x_ref[:, :d]
    x2 = x_ref[:, d:]
    x1_f32 = x1.astype(jnp.float32)
    x2_f32 = x2.astype(jnp.float32)

    # Weights live as bf16 MXU operands; biases stay f32 (read once, plain VPU adds).
    w1f = w1f_ref[...]
    w2f = w2f_ref[...]
    w1g = w1g_ref[...]
    w2g = w2g_ref[...]
    b1f = b1f_ref[...]
    b2f = b2f_ref[...]
    b1g = b1g_ref[...]
    b2g = b2g_ref[...]

    # y1 = x1 + f(x2)
    hf = _gelu(jnp.dot(x2.astype(matmul_dtype), w1f,
                       preferred_element_type=jnp.float32) + b1f)
    y1 = x1_f32 + jnp.dot(hf.astype(matmul_dtype), w2f,
                          preferred_element_type=jnp.float32) + b2f

    # y2 = x2 + g(y1)
    hg = _gelu(jnp.dot(y1.astype(matmul_dtype), w1g,
                       preferred_element_type=jnp.float32) + b1g)
    y2 = x2_f32 + jnp.dot(hg.astype(matmul_dtype), w2g,
                          preferred_element_type=jnp.float32) + b2g

    # concat(dim=feature) == two direct slice stores (no XLU concat, no temporary).
    o_ref[:, :d] = y1.astype(o_ref.dtype)
    o_ref[:, d:] = y2.astype(o_ref.dtype)


def _choose_tm(M, D2, H, x_itemsize, out_itemsize, tile_budget_bytes):
    """Pick the row-tile size from a VMEM budget; keep a few grid steps when M is large."""
    # Per-row VMEM: double-buffered input + output tiles, plus f32 intermediates
    # (hf/hg of width H and the y1/residual temporaries of width ~D2).
    per_row = 2 * D2 * x_itemsize + 2 * D2 * out_itemsize + 4 * (2 * H + D2)
    tm = int(tile_budget_bytes // max(per_row, 1))
    tm = max(8, min(tm, 8192))
    tm = (tm // 8) * 8
    if M <= tm:
        # Single block covering all rows; block dim == full array extent is always legal.
        return M
    # Keep >=4 grid steps so the 'parallel' axis can shard across TCs (v7x megacore).
    tm = min(tm, max(512, _round_up(pl.cdiv(M, 4), 8)))
    return max(8, (tm // 8) * 8)


def reversible_block_forward(x, params, *, tm=None, matmul_dtype=jnp.bfloat16,
                             tile_budget_bytes=32 * 1024 * 1024,
                             vmem_limit_bytes=48 * 1024 * 1024):
    """x: (B, S, 2*D). Returns (B, S, 2*D) with the same dtype as x."""
    B, S, D2 = x.shape
    assert D2 % 2 == 0
    D = D2 // 2
    H = params["w1f"].shape[1]
    M = B * S
    out_dtype = x.dtype

    # Flatten (B, S) -> M rows; keep features on the lane axis. Free contiguous reshape.
    x2d = x.reshape(M, D2)

    if tm is None:
        tm_eff = _choose_tm(M, D2, H,
                            jnp.dtype(x.dtype).itemsize,
                            jnp.dtype(out_dtype).itemsize,
                            tile_budget_bytes)
    else:
        tm_eff = min(tm, M)
        if tm_eff != M:
            tm_eff = max(8, (tm_eff // 8) * 8)

    # Ragged grid: no padding, no output trim. Pallas masks the partial last block.
    grid = (pl.cdiv(M, tm_eff),)

    # Weights as bf16 MXU operands (single MXU pass); biases stay f32.
    w1f = params["w1f"].astype(matmul_dtype)
    w2f = params["w2f"].astype(matmul_dtype)
    w1g = params["w1g"].astype(matmul_dtype)
    w2g = params["w2g"].astype(matmul_dtype)
    b1f = params["b1f"].astype(jnp.float32)
    b2f = params["b2f"].astype(jnp.float32)
    b1g = params["b1g"].astype(jnp.float32)
    b2g = params["b2g"].astype(jnp.float32)

    x_spec = pl.BlockSpec((tm_eff, D2), lambda i: (i, 0))
    w_in_spec = pl.BlockSpec((D, H), lambda i: (0, 0))
    b_in_spec = pl.BlockSpec((1, H), lambda i: (0, 0))
    w_out_spec = pl.BlockSpec((H, D), lambda i: (0, 0))
    b_out_spec = pl.BlockSpec((1, D), lambda i: (0, 0))
    out_spec = pl.BlockSpec((tm_eff, D2), lambda i: (i, 0))

    kernel = functools.partial(_rev_block_kernel, d=D, matmul_dtype=matmul_dtype)

    out = pl.pallas_call(
        kernel,
        out_shape=jax.ShapeDtypeStruct((M, D2), out_dtype),
        grid_spec=pltpu.PrefetchScalarGridSpec(
            num_scalar_prefetch=0,
            grid=grid,
            in_specs=[x_spec,
                      w_in_spec, b_in_spec, w_out_spec, b_out_spec,
                      w_in_spec, b_in_spec, w_out_spec, b_out_spec],
            out_specs=out_spec,
        ),
        compiler_params=pltpu.CompilerParams(
            dimension_semantics=("parallel",),
            vmem_limit_bytes=vmem_limit_bytes,
        ),
    )(x2d,
      w1f, b1f, w2f, b2f,
      w1g, b1g, w2g, b2g)

    return out.reshape(B, S, D2)


def _reference(x, params, matmul_dtype=jnp.float32):
    """Pure-JAX reference; matmul_dtype mirrors the kernel's MXU operand precision."""
    D = x.shape[-1] // 2
    x1 = x[..., :D].astype(jnp.float32)
    x2 = x[..., D:].astype(jnp.float32)

    def mlp(v, w1, b1, w2, b2):
        h = _gelu(jnp.dot(v.astype(matmul_dtype), w1.astype(matmul_dtype),
                          preferred_element_type=jnp.float32) + b1[0])
        return jnp.dot(h.astype(matmul_dtype), w2.astype(matmul_dtype),
                       preferred_element_type=jnp.float32) + b2[0]

    y1 = x1 + mlp(x2, params["w1f"], params["b1f"], params["w2f"], params["b2f"])
    y2 = x2 + mlp(y1, params["w1g"], params["b1g"], params["w2g"], params["b2g"])
    return jnp.concatenate([y1, y2], axis=-1).astype(x.dtype)


def _init_params(key, dim, hidden):
    ks = jax.random.split(key, 8)
    s_in = 1.0 / jnp.sqrt(dim)
    s_hid = 1.0 / jnp.sqrt(hidden)
    return {
        "w1f": jax.random.uniform(ks[0], (dim, hidden), jnp.float32, -s_in, s_in),
        "b1f": jax.random.uniform(ks[1], (1, hidden), jnp.float32, -s_in, s_in),
        "w2f": jax.random.uniform(ks[2], (hidden, dim), jnp.float32, -s_hid, s_hid),
        "b2f": jax.random.uniform(ks[3], (1, dim), jnp.float32, -s_hid, s_hid),
        "w1g": jax.random.uniform(ks[4], (dim, hidden), jnp.float32, -s_in, s_in),
        "b1g": jax.random.uniform(ks[5], (1, hidden), jnp.float32, -s_in, s_in),
        "w2g": jax.random.uniform(ks[6], (hidden, dim), jnp.float32, -s_hid, s_hid),
        "b2g": jax.random.uniform(ks[7], (1, dim), jnp.float32, -s_hid, s_hid),
    }


if __name__ == "__main__":
    key = jax.random.PRNGKey(0)
    k_x, k_x2, k_p = jax.random.split(key, 3)

    B, S, D = 2, 8, 32       # x has 2*D = 64 features; chunk dim=2 -> two 32-dim halves
    H = 128                  # hidden width of f / g MLPs

    x = jax.random.normal(k_x, (B, S, 2 * D), dtype=jnp.float32)
    params = _init_params(k_p, D, H)

    # --- small demo shape (single block, VMEM-budget tile clamps to M) ---
    out = reversible_block_forward(x, params)
    out = jax.block_until_ready(out)
    assert out.shape == (B, S, 2 * D)

    # Tight check vs a reference mirroring the kernel math (bf16 MXU, f32 acc, tanh GELU).
    ref_bf16 = _reference(x, params, matmul_dtype=jnp.bfloat16)
    assert jnp.allclose(out, ref_bf16, atol=2e-3, rtol=2e-3), "mismatch vs bf16 reference"

    # Loose sanity check against the full-f32 math of the original module.
    ref_f32 = _reference(x, params, matmul_dtype=jnp.float32)
    assert jnp.allclose(out, ref_f32, atol=5e-2, rtol=5e-2), "mismatch vs f32 reference"

    # --- ragged-grid path: M not a multiple of the tile, no padding / trimming ---
    B2, S2 = 4, 300          # M = 1200, forced tm = 512 -> grid of 3 with a partial tail block
    xr = jax.random.normal(k_x2, (B2, S2, 2 * D), dtype=jnp.float32)
    out_r = jax.block_until_ready(reversible_block_forward(xr, params, tm=512))
    ref_r = _reference(xr, params, matmul_dtype=jnp.bfloat16)
    assert out_r.shape == (B2, S2, 2 * D)
    assert jnp.allclose(out_r, ref_r, atol=2e-3, rtol=2e-3), "ragged-grid mismatch"

    print("KERNEL_OK")
</pallas_src>

<mosaic_0001>
module attributes {stable_mosaic.version = 11 : i64} {
  func.func @_rev_block_kernel(%arg0: i32, %arg1: memref<16x64xf32, #tpu.memory_space<vmem>>, %arg2: memref<32x128xbf16, #tpu.memory_space<vmem>>, %arg3: memref<1x128xf32, #tpu.memory_space<vmem>>, %arg4: memref<128x32xbf16, #tpu.memory_space<vmem>>, %arg5: memref<1x32xf32, #tpu.memory_space<vmem>>, %arg6: memref<32x128xbf16, #tpu.memory_space<vmem>>, %arg7: memref<1x128xf32, #tpu.memory_space<vmem>>, %arg8: memref<128x32xbf16, #tpu.memory_space<vmem>>, %arg9: memref<1x32xf32, #tpu.memory_space<vmem>>, %arg10: memref<16x64xf32, #tpu.memory_space<vmem>>) attributes {dimension_semantics = [#tpu.dimension_semantics<parallel>], iteration_bounds = array<i64: 1>, scalar_prefetch = 0 : i64, scratch_operands = 0 : i64, tpu.core_type = #tpu.core_type<tc>, window_params = [{transform_indices = @transform_0, window_bounds = array<i64: 16, 64>}, {pipeline_mode = #tpu.pipeline_mode<synchronous>, transform_indices = @transform_1, window_bounds = array<i64: 32, 128>}, {pipeline_mode = #tpu.pipeline_mode<synchronous>, transform_indices = @transform_2, window_bounds = array<i64: 1, 128>}, {pipeline_mode = #tpu.pipeline_mode<synchronous>, transform_indices = @transform_3, window_bounds = array<i64: 128, 32>}, {pipeline_mode = #tpu.pipeline_mode<synchronous>, transform_indices = @transform_4, window_bounds = array<i64: 1, 32>}, {pipeline_mode = #tpu.pipeline_mode<synchronous>, transform_indices = @transform_5, window_bounds = array<i64: 32, 128>}, {pipeline_mode = #tpu.pipeline_mode<synchronous>, transform_indices = @transform_6, window_bounds = array<i64: 1, 128>}, {pipeline_mode = #tpu.pipeline_mode<synchronous>, transform_indices = @transform_7, window_bounds = array<i64: 128, 32>}, {pipeline_mode = #tpu.pipeline_mode<synchronous>, transform_indices = @transform_8, window_bounds = array<i64: 1, 32>}, {transform_indices = @transform_9, window_bounds = array<i64: 16, 64>}]} {
    %c0 = arith.constant 0 : index
    %c0_0 = arith.constant 0 : index
    %0 = vector.load %arg1[%c0, %c0_0] : memref<16x64xf32, #tpu.memory_space<vmem>>, vector<16x32xf32>
    %c0_1 = arith.constant 0 : index
    %c32 = arith.constant 32 : index
    %1 = vector.load %arg1[%c0_1, %c32] : memref<16x64xf32, #tpu.memory_space<vmem>>, vector<16x32xf32>
    %c0_2 = arith.constant 0 : index
    %c0_3 = arith.constant 0 : index
    %2 = vector.load %arg2[%c0_2, %c0_3] : memref<32x128xbf16, #tpu.memory_space<vmem>>, vector<32x128xbf16>
    %c0_4 = arith.constant 0 : index
    %c0_5 = arith.constant 0 : index
    %3 = vector.load %arg4[%c0_4, %c0_5] : memref<128x32xbf16, #tpu.memory_space<vmem>>, vector<128x32xbf16>
    %c0_6 = arith.constant 0 : index
    %c0_7 = arith.constant 0 : index
    %4 = vector.load %arg6[%c0_6, %c0_7] : memref<32x128xbf16, #tpu.memory_space<vmem>>, vector<32x128xbf16>
    %c0_8 = arith.constant 0 : index
    %c0_9 = arith.constant 0 : index
    %5 = vector.load %arg8[%c0_8, %c0_9] : memref<128x32xbf16, #tpu.memory_space<vmem>>, vector<128x32xbf16>
    %c0_10 = arith.constant 0 : index
    %c0_11 = arith.constant 0 : index
    %6 = vector.load %arg3[%c0_10, %c0_11] : memref<1x128xf32, #tpu.memory_space<vmem>>, vector<1x128xf32>
    %c0_12 = arith.constant 0 : index
    %c0_13 = arith.constant 0 : index
    %7 = vector.load %arg5[%c0_12, %c0_13] : memref<1x32xf32, #tpu.memory_space<vmem>>, vector<1x32xf32>
    %c0_14 = arith.constant 0 : index
    %c0_15 = arith.constant 0 : index
    %8 = vector.load %arg7[%c0_14, %c0_15] : memref<1x128xf32, #tpu.memory_space<vmem>>, vector<1x128xf32>
    %c0_16 = arith.constant 0 : index
    %c0_17 = arith.constant 0 : index
    %9 = vector.load %arg9[%c0_16, %c0_17] : memref<1x32xf32, #tpu.memory_space<vmem>>, vector<1x32xf32>
    %10 = arith.truncf %1 : vector<16x32xf32> to vector<16x32xbf16>
    %cst = arith.constant dense<0.000000e+00> : vector<16x128xf32>
    %11 = tpu.matmul %10, %2, %cst {dimension_numbers = #tpu.dot_dimension_numbers<[1], [0], [0], [1], [0, 0, 1, 1], [], []>} : vector<16x32xbf16>, vector<32x128xbf16>, vector<16x128xf32> -> vector<16x128xf32>
    %12 = vector.broadcast %6 : vector<1x128xf32> to vector<16x128xf32>
    %13 = arith.addf %11, %12 : vector<16x128xf32>
    %14 = arith.mulf %13, %13 : vector<16x128xf32>
    %15 = arith.mulf %13, %14 : vector<16x128xf32>
    %cst_18 = arith.constant 4.471500e-02 : f32
    %16 = vector.broadcast %cst_18 : f32 to vector<16x128xf32>
    %17 = arith.mulf %16, %15 : vector<16x128xf32>
    %18 = arith.addf %13, %17 : vector<16x128xf32>
    %cst_19 = arith.constant 0.797884583 : f32
    %19 = vector.broadcast %cst_19 : f32 to vector<16x128xf32>
    %20 = arith.mulf %19, %18 : vector<16x128xf32>
    %21 = math.tanh %20 : vector<16x128xf32>
    %cst_20 = arith.constant 1.000000e+00 : f32
    %22 = vector.broadcast %cst_20 : f32 to vector<16x128xf32>
    %23 = arith.addf %22, %21 : vector<16x128xf32>
    %cst_21 = arith.constant 5.000000e-01 : f32
    %24 = vector.broadcast %cst_21 : f32 to vector<16x128xf32>
    %25 = arith.mulf %24, %23 : vector<16x128xf32>
    %26 = arith.mulf %13, %25 : vector<16x128xf32>
    %27 = arith.truncf %26 : vector<16x128xf32> to vector<16x128xbf16>
    %cst_22 = arith.constant dense<0.000000e+00> : vector<16x32xf32>
    %28 = tpu.matmul %27, %3, %cst_22 {dimension_numbers = #tpu.dot_dimension_numbers<[1], [0], [0], [1], [0, 0, 1, 1], [], []>} : vector<16x128xbf16>, vector<128x32xbf16>, vector<16x32xf32> -> vector<16x32xf32>
    %29 = arith.addf %0, %28 : vector<16x32xf32>
    %30 = vector.broadcast %7 : vector<1x32xf32> to vector<16x32xf32>
    %31 = arith.addf %29, %30 : vector<16x32xf32>
    %32 = arith.truncf %31 : vector<16x32xf32> to vector<16x32xbf16>
    %cst_23 = arith.constant dense<0.000000e+00> : vector<16x128xf32>
    %33 = tpu.matmul %32, %4, %cst_23 {dimension_numbers = #tpu.dot_dimension_numbers<[1], [0], [0], [1], [0, 0, 1, 1], [], []>} : vector<16x32xbf16>, vector<32x128xbf16>, vector<16x128xf32> -> vector<16x128xf32>
    %34 = vector.broadcast %8 : vector<1x128xf32> to vector<16x128xf32>
    %35 = arith.addf %33, %34 : vector<16x128xf32>
    %36 = arith.mulf %35, %35 : vector<16x128xf32>
    %37 = arith.mulf %35, %36 : vector<16x128xf32>
    %cst_24 = arith.constant 4.471500e-02 : f32
    %38 = vector.broadcast %cst_24 : f32 to vector<16x128xf32>
    %39 = arith.mulf %38, %37 : vector<16x128xf32>
    %40 = arith.addf %35, %39 : vector<16x128xf32>
    %cst_25 = arith.constant 0.797884583 : f32
    %41 = vector.broadcast %cst_25 : f32 to vector<16x128xf32>
    %42 = arith.mulf %41, %40 : vector<16x128xf32>
    %43 = math.tanh %42 : vector<16x128xf32>
    %cst_26 = arith.constant 1.000000e+00 : f32
    %44 = vector.broadcast %cst_26 : f32 to vector<16x128xf32>
    %45 = arith.addf %44, %43 : vector<16x128xf32>
    %cst_27 = arith.constant 5.000000e-01 : f32
    %46 = vector.broadcast %cst_27 : f32 to vector<16x128xf32>
    %47 = arith.mulf %46, %45 : vector<16x128xf32>
    %48 = arith.mulf %35, %47 : vector<16x128xf32>
    %49 = arith.truncf %48 : vector<16x128xf32> to vector<16x128xbf16>
    %cst_28 = arith.constant dense<0.000000e+00> : vector<16x32xf32>
    %50 = tpu.matmul %49, %5, %cst_28 {dimension_numbers = #tpu.dot_dimension_numbers<[1], [0], [0], [1], [0, 0, 1, 1], [], []>} : vector<16x128xbf16>, vector<128x32xbf16>, vector<16x32xf32> -> vector<16x32xf32>
    %51 = arith.addf %1, %50 : vector<16x32xf32>
    %52 = vector.broadcast %9 : vector<1x32xf32> to vector<16x32xf32>
    %53 = arith.addf %51, %52 : vector<16x32xf32>
    %c0_29 = arith.constant 0 : index
    %c0_30 = arith.constant 0 : index
    %54 = vector.load %arg10[%c0_29, %c0_30] : memref<16x64xf32, #tpu.memory_space<vmem>>, vector<16x32xf32>
    tpu.vector_store %arg10[%c0_29, %c0_30], %31 {strides = array<i32>} : memref<16x64xf32, #tpu.memory_space<vmem>>, vector<16x32xf32>,
    %c0_31 = arith.constant 0 : index
    %c32_32 = arith.constant 32 : index
    %55 = vector.load %arg10[%c0_31, %c32_32] : memref<16x64xf32, #tpu.memory_space<vmem>>, vector<16x32xf32>
    tpu.vector_store %arg10[%c0_31, %c32_32], %53 {strides = array<i32>} : memref<16x64xf32, #tpu.memory_space<vmem>>, vector<16x32xf32>,
    return
  }
  func.func @transform_0(%arg0: i32) -> (i32, i32) {
    %c0_i32 = arith.constant 0 : i32
    %c0_i32_0 = arith.constant 0 : i32
    return %arg0, %c0_i32 : i32, i32
  }
  func.func @transform_1(%arg0: i32) -> (i32, i32) {
    %c0_i32 = arith.constant 0 : i32
    %c0_i32_0 = arith.constant 0 : i32
    %c0_i32_1 = arith.constant 0 : i32
    return %c0_i32, %c0_i32_0 : i32, i32
  }
  func.func @transform_2(%arg0: i32) -> (i32, i32) {
    %c0_i32 = arith.constant 0 : i32
    %c0_i32_0 = arith.constant 0 : i32
    %c0_i32_1 = arith.constant 0 : i32
    return %c0_i32, %c0_i32_0 : i32, i32
  }
  func.func @transform_3(%arg0: i32) -> (i32, i32) {
    %c0_i32 = arith.constant 0 : i32
    %c0_i32_0 = arith.constant 0 : i32
    %c0_i32_1 = arith.constant 0 : i32
    return %c0_i32, %c0_i32_0 : i32, i32
  }
  func.func @transform_4(%arg0: i32) -> (i32, i32) {
    %c0_i32 = arith.constant 0 : i32
    %c0_i32_0 = arith.constant 0 : i32
    %c0_i32_1 = arith.constant 0 : i32
    return %c0_i32, %c0_i32_0 : i32, i32
  }
  func.func @transform_5(%arg0: i32) -> (i32, i32) {
    %c0_i32 = arith.constant 0 : i32
    %c0_i32_0 = arith.constant 0 : i32
    %c0_i32_1 = arith.constant 0 : i32
    return %c0_i32, %c0_i32_0 : i32, i32
  }
  func.func @transform_6(%arg0: i32) -> (i32, i32) {
    %c0_i32 = arith.constant 0 : i32
    %c0_i32_0 = arith.constant 0 : i32
    %c0_i32_1 = arith.constant 0 : i32
    return %c0_i32, %c0_i32_0 : i32, i32
  }
  func.func @transform_7(%arg0: i32) -> (i32, i32) {
    %c0_i32 = arith.constant 0 : i32
    %c0_i32_0 = arith.constant 0 : i32
    %c0_i32_1 = arith.constant 0 : i32
    return %c0_i32, %c0_i32_0 : i32, i32
  }
  func.func @transform_8(%arg0: i32) -> (i32, i32) {
    %c0_i32 = arith.constant 0 : i32
    %c0_i32_0 = arith.constant 0 : i32
    %c0_i32_1 = arith.constant 0 : i32
    return %c0_i32, %c0_i32_0 : i32, i32
  }
  func.func @transform_9(%arg0: i32) -> (i32, i32) {
    %c0_i32 = arith.constant 0 : i32
    %c0_i32_0 = arith.constant 0 : i32
    return %arg0, %c0_i32 : i32, i32
  }
}

</mosaic_0001>

<llo_original>
// kernel: tpu_custom_call.1
$region0: #{tpu_custom_call.1}
  #allocation0 [shape = 'u32[]', space=smem, size = 0x4, offset = 0x4, fixed_abs, tag = 'smem constant byte address 0x4 - core index']
  #allocation1 [shape = 'u32[72,128]{1,0:T(1,128)}', space=vmem, size = 0x9000, scoped, tag = 'internal scratch']
  %s0 = inlined_call_operand.vmem [shape: f32[16,64], index: 0, kind: input, shape index: {}]
  %s1 = inlined_call_operand.vmem [shape: bf16[32,128], index: 1, kind: input, shape index: {}]
  %s2 = inlined_call_operand.vmem [shape: f32[1,128], index: 2, kind: input, shape index: {}]
  %s3 = inlined_call_operand.vmem [shape: bf16[128,32], index: 3, kind: input, shape index: {}]
  %s4 = inlined_call_operand.vmem [shape: f32[1,32], index: 4, kind: input, shape index: {}]
  %s5 = inlined_call_operand.vmem [shape: bf16[32,128], index: 5, kind: input, shape index: {}]
  %s6 = inlined_call_operand.vmem [shape: f32[1,128], index: 6, kind: input, shape index: {}]
  %s7 = inlined_call_operand.vmem [shape: bf16[128,32], index: 7, kind: input, shape index: {}]
  %s8 = inlined_call_operand.vmem [shape: f32[1,32], index: 8, kind: input, shape index: {}]
  %s9 = inlined_call_operand.hbm [shape: f32[16,64], index: 9, kind: output, shape index: {}]
  %s10 = sld [smem:[#allocation0]]
  $region46: #{tpu_custom_call.1} parent=0
    _
  %s12 = ssub.s32 1, %s10
  %s13 = scalar_select 0, %s12, %s10
  $region1: #{tpu_custom_call.1} parent=0
    #allocation2 [shape = 'u8[8192]{0}', space=vmem, size = 0x2000, scoped, tag = 'output window, operand 0, single buffered']
    #allocation3 [shape = 's32[1]{0}', space=sflag, size = 0x4, scoped, tag = 'scoped memory for tpu_custom_call.1']
    %14 = vsyncpa [#allocation3], 0
    // Predicated region
    $region2: #{tpu_custom_call.1} parent=1 // pred_check
      _
    $region3: #{tpu_custom_call.1} parent=1 // pred_check_branch
      %16 = sbr.rel (0) target = $region5
    $region4: #{tpu_custom_call.1} parent=1 // pred_region
      _
    $region5: #{tpu_custom_call.1} parent=1 // pred_fallthru
      _
    // Predicated region
    $region6: #{tpu_custom_call.1} parent=1 // pred_check
      _
    $region7: #{tpu_custom_call.1} parent=1 // pred_check_branch
      %18 = sbr.rel (0) target = $region9
    $region8: #{tpu_custom_call.1} parent=1 // pred_region
      _
    $region9: #{tpu_custom_call.1} parent=1 // pred_fallthru
      _
    // Predicated region
    $region10: #{tpu_custom_call.1} parent=1 // pred_check
      _
    $region11: #{tpu_custom_call.1} parent=1 // pred_check_branch
      %20 = sbr.rel (0) target = $region13
    $region12: #{tpu_custom_call.1} parent=1 // pred_region
      _
    $region13: #{tpu_custom_call.1} parent=1 // pred_fallthru
      _
    // Predicated region
    $region14: #{tpu_custom_call.1} parent=1 // pred_check
      _
    $region15: #{tpu_custom_call.1} parent=1 // pred_check_branch
      %22 = sbr.rel (0) target = $region17
    $region16: #{tpu_custom_call.1} parent=1 // pred_region
      _
    $region17: #{tpu_custom_call.1} parent=1 // pred_fallthru
      _
    // Predicated region
    $region18: #{tpu_custom_call.1} parent=1 // pred_check
      _
    $region19: #{tpu_custom_call.1} parent=1 // pred_check_branch
      %24 = sbr.rel (0) target = $region21
    $region20: #{tpu_custom_call.1} parent=1 // pred_region
      _
    $region21: #{tpu_custom_call.1} parent=1 // pred_fallthru
      _
    // Predicated region
    $region22: #{tpu_custom_call.1} parent=1 // pred_check
      _
    $region23: #{tpu_custom_call.1} parent=1 // pred_check_branch
      %26 = sbr.rel (0) target = $region25
    $region24: #{tpu_custom_call.1} parent=1 // pred_region
      _
    $region25: #{tpu_custom_call.1} parent=1 // pred_fallthru
      _
    // Predicated region
    $region26: #{tpu_custom_call.1} parent=1 // pred_check
      _
    $region27: #{tpu_custom_call.1} parent=1 // pred_check_branch
      %28 = sbr.rel (0) target = $region29
    $region28: #{tpu_custom_call.1} parent=1 // pred_region
      _
    $region29: #{tpu_custom_call.1} parent=1 // pred_fallthru
      _
    // Predicated region
    $region30: #{tpu_custom_call.1} parent=1 // pred_check
      _
    $region31: #{tpu_custom_call.1} parent=1 // pred_check_branch
      %30 = sbr.rel (0) target = $region33
    $region32: #{tpu_custom_call.1} parent=1 // pred_region
      _
    $region33: #{tpu_custom_call.1} parent=1 // pred_fallthru
      _
    // Predicated region
    $region34: #{tpu_custom_call.1} parent=1 // pred_check
      _
    $region35: #{tpu_custom_call.1} parent=1 // pred_check_branch
      %32 = sbr.rel (0) target = $region37
    $region36: #{tpu_custom_call.1} parent=1 // pred_region
      _
    $region37: #{tpu_custom_call.1} parent=1 // pred_fallthru
      _
    %v34 = vld [vmem:[%s0] sm:$0xff]
    %v35 = vld [vmem:[%s0 + $0x8] sm:$0xff]
    %v36 = vld [vmem:[%s1] sm:$0xf]
    %v37 = vld [vmem:[%s1 + $0x4] sm:$0xf]
    %v38 = vld [vmem:[%s1 + $0x8] sm:$0xf]
    %v39 = vld [vmem:[%s1 + $0xc] sm:$0xf]
    %v40 = vld [vmem:[%s3] sm:$0xf]
    %v41 = vld [vmem:[%s3 + $0x4] sm:$0xf]
    %v42 = vld [vmem:[%s3 + $0x8] sm:$0xf]
    %v43 = vld [vmem:[%s3 + $0xc] sm:$0xf]
    %v44 = vld [vmem:[%s3 + $0x10] sm:$0xf]
    %v45 = vld [vmem:[%s3 + $0x14] sm:$0xf]
    %v46 = vld [vmem:[%s3 + $0x18] sm:$0xf]
    %v47 = vld [vmem:[%s3 + $0x1c] sm:$0xf]
    %v48 = vld [vmem:[%s3 + $0x20] sm:$0xf]
    %v49 = vld [vmem:[%s3 + $0x24] sm:$0xf]
    %v50 = vld [vmem:[%s3 + $0x28] sm:$0xf]
    %v51 = vld [vmem:[%s3 + $0x2c] sm:$0xf]
    %v52 = vld [vmem:[%s3 + $0x30] sm:$0xf]
    %v53 = vld [vmem:[%s3 + $0x34] sm:$0xf]
    %v54 = vld [vmem:[%s3 + $0x38] sm:$0xf]
    %v55 = vld [vmem:[%s3 + $0x3c] sm:$0xf]
    %v56 = vld [vmem:[%s5] sm:$0xf]
    %v57 = vld [vmem:[%s5 + $0x4] sm:$0xf]
    %v58 = vld [vmem:[%s5 + $0x8] sm:$0xf]
    %v59 = vld [vmem:[%s5 + $0xc] sm:$0xf]
    %v60 = vld [vmem:[%s7] sm:$0xf]
    %v61 = vld [vmem:[%s7 + $0x4] sm:$0xf]
    %v62 = vld [vmem:[%s7 + $0x8] sm:$0xf]
    %v63 = vld [vmem:[%s7 + $0xc] sm:$0xf]
    %v64 = vld [vmem:[%s7 + $0x10] sm:$0xf]
    %v65 = vld [vmem:[%s7 + $0x14] sm:$0xf]
    %v66 = vld [vmem:[%s7 + $0x18] sm:$0xf]
    %v67 = vld [vmem:[%s7 + $0x1c] sm:$0xf]
    %v68 = vld [vmem:[%s7 + $0x20] sm:$0xf]
    %v69 = vld [vmem:[%s7 + $0x24] sm:$0xf]
    %v70 = vld [vmem:[%s7 + $0x28] sm:$0xf]
    %v71 = vld [vmem:[%s7 + $0x2c] sm:$0xf]
    %v72 = vld [vmem:[%s7 + $0x30] sm:$0xf]
    %v73 = vld [vmem:[%s7 + $0x34] sm:$0xf]
    %v74 = vld [vmem:[%s7 + $0x38] sm:$0xf]
    %v75 = vld [vmem:[%s7 + $0x3c] sm:$0xf]
    %v76 = vld [vmem:[%s2] sm:$0x1]
    %v77 = vld [vmem:[%s4] sm:$0x1]
    %v78 = vld [vmem:[%s6] sm:$0x1]
    %v79 = vld [vmem:[%s8] sm:$0x1]
    %v80 = vpack.c.bf16 %v35, %v34
    %v82 = vperm.slane %v76, 0
    %85 = vrot.lane.b32.xlu0 %v80, 96
    %v86 = vpop.permute.xlu0 %85
    %v91 = vunpack.c.l.b16 %v36
    %v92 = vunpack.c.l.b16 %v37
    %v93 = vunpack.c.l.b16 %v38
    %v94 = vunpack.c.l.b16 %v39
    %v95 = vpack.c.b16 %v92, %v91
    %v96 = vpack.c.b16 %v94, %v93
    %vm99 = vcmask 261120
    %v101 = vsel %vm99, %v86, 0
    %103 = vmatpush.bf16.msra.mxu0 0
    %104 = vmatpush.bf16.msra.mxu0 0
    %105 = vmatpush.bf16.msra.mxu0 0
    %106 = vmatpush.bf16.msra.mxu0 0
    %107 = vmatpush.bf16.msra.mxu0 0
    %108 = vmatpush.bf16.msra.mxu0 0
    %109 = vmatpush.bf16.msra.mxu0 %v96
    %110 = vmatpush.bf16.msra.mxu0 %v95
    %111 = vmatmul.bf16.gmra.mxu0 %v101
    %v112 = vpop.f32.mrf.mxu0
    %v113 = vadd.f32 %v82, %v112
    %v114 = vpop.f32.mrf.mxu0
    %v115 = vadd.f32 %v82, %v114
    %116 = vdwg.mxu0
    %v117 = vmul.f32 %v113, %v113
    %v118 = vmul.f32 %v115, %v115
    %v119 = vmul.f32 %v113, %v117
    %v120 = vmul.f32 %v115, %v118
    %v121 = vmul.f32 %v119, 0.044715
    %v122 = vmul.f32 %v120, 0.044715
    %v123 = vadd.f32 %v113, %v121
    %v124 = vadd.f32 %v115, %v122
    %v125 = vmul.f32 %v123, 0.7978846
    %v126 = vmul.f32 %v124, 0.7978846
    %v127 = vtanh.pop %v125
    %v128 = vtanh.pop %v126
    %v129 = vadd.f32 %v127, 1.0
    %v130 = vadd.f32 %v128, 1.0
    %v131 = vmul.f32 %v129, 0.5
    %v132 = vmul.f32 %v130, 0.5
    %v133 = vmul.f32 %v113, %v131
    %v134 = vmul.f32 %v115, %v132
    %v135 = vpack.c.bf16 %v134, %v133
    %v152 = vunpack.c.l.b16 %v40
    %v153 = vunpack.c.l.b16 %v41
    %v154 = vunpack.c.l.b16 %v42
    %v155 = vunpack.c.l.b16 %v43
    %v156 = vunpack.c.l.b16 %v44
    %v157 = vunpack.c.l.b16 %v45
    %v158 = vunpack.c.l.b16 %v46
    %v159 = vunpack.c.l.b16 %v47
    %v160 = vunpack.c.l.b16 %v48
    %v161 = vunpack.c.l.b16 %v49
    %v162 = vunpack.c.l.b16 %v50
    %v163 = vunpack.c.l.b16 %v51
    %v164 = vunpack.c.l.b16 %v52
    %v165 = vunpack.c.l.b16 %v53
    %v166 = vunpack.c.l.b16 %v54
    %v167 = vunpack.c.l.b16 %v55
    %v168 = vpack.c.b16 %v153, %v152
    %v169 = vpack.c.b16 %v155, %v154
    %v170 = vpack.c.b16 %v157, %v156
    %v171 = vpack.c.b16 %v159, %v158
    %v172 = vpack.c.b16 %v161, %v160
    %v173 = vpack.c.b16 %v163, %v162
    %v174 = vpack.c.b16 %v165, %v164
    %v175 = vpack.c.b16 %v167, %v166
    %184 = vmatpush.bf16.msra.mxu0 %v175
    %185 = vmatpush.bf16.msra.mxu0 %v174
    %186 = vmatpush.bf16.msra.mxu0 %v173
    %187 = vmatpush.bf16.msra.mxu0 %v172
    %188 = vmatpush.bf16.msra.mxu0 %v171
    %189 = vmatpush.bf16.msra.mxu0 %v170
    %190 = vmatpush.bf16.msra.mxu0 %v169
    %191 = vmatpush.bf16.msra.mxu0 %v168
    %192 = vmatmul.bf16.gmra.mxu0 %v135
    %v193 = vpop.f32.mrf.mxu0
    %v194 = vadd.f32 0.0, %v193
    %v195 = vpop.f32.mrf.mxu0
    %v196 = vadd.f32 0.0, %v195
    %197 = vdwg.mxu0
    %v198 = vadd.f32 %v34, %v194
    %v199 = vadd.f32 %v35, %v196
    %v201 = vperm.slane %v77, 0
    %v203 = vadd.f32 %v198, %v201
    %v204 = vadd.f32 %v199, %v201
    %v205 = vpack.c.bf16 %v204, %v203
    %v207 = vperm.slane %v78, 0
    %v213 = vunpack.c.l.b16 %v56
    %v214 = vunpack.c.l.b16 %v57
    %v215 = vunpack.c.l.b16 %v58
    %v216 = vunpack.c.l.b16 %v59
    %v217 = vpack.c.b16 %v214, %v213
    %v218 = vpack.c.b16 %v216, %v215
    %v222 = vsel %vm99, %v205, 0
    %224 = vmatpush.bf16.msra.mxu0 0
    %225 = vmatpush.bf16.msra.mxu0 0
    %226 = vmatpush.bf16.msra.mxu0 0
    %227 = vmatpush.bf16.msra.mxu0 0
    %228 = vmatpush.bf16.msra.mxu0 0
    %229 = vmatpush.bf16.msra.mxu0 0
    %230 = vmatpush.bf16.msra.mxu0 %v218
    %231 = vmatpush.bf16.msra.mxu0 %v217
    %232 = vmatmul.bf16.gmra.mxu0 %v222
    %v233 = vpop.f32.mrf.mxu0
    %v234 = vadd.f32 %v207, %v233
    %v235 = vpop.f32.mrf.mxu0
    %v236 = vadd.f32 %v207, %v235
    %237 = vdwg.mxu0
    %v238 = vmul.f32 %v234, %v234
    %v239 = vmul.f32 %v236, %v236
    %v240 = vmul.f32 %v234, %v238
    %v241 = vmul.f32 %v236, %v239
    %v242 = vmul.f32 %v240, 0.044715
    %v243 = vmul.f32 %v241, 0.044715
    %v244 = vadd.f32 %v234, %v242
    %v245 = vadd.f32 %v236, %v243
    %v246 = vmul.f32 %v244, 0.7978846
    %v247 = vmul.f32 %v245, 0.7978846
    %v248 = vtanh.pop %v246
    %v249 = vtanh.pop %v247
    %v250 = vadd.f32 %v248, 1.0
    %v251 = vadd.f32 %v249, 1.0
    %v252 = vmul.f32 %v250, 0.5
    %v253 = vmul.f32 %v251, 0.5
    %v254 = vmul.f32 %v234, %v252
    %v255 = vmul.f32 %v236, %v253
    %v256 = vpack.c.bf16 %v255, %v254
    %v273 = vunpack.c.l.b16 %v60
    %v274 = vunpack.c.l.b16 %v61
    %v275 = vunpack.c.l.b16 %v62
    %v276 = vunpack.c.l.b16 %v63
    %v277 = vunpack.c.l.b16 %v64
    %v278 = vunpack.c.l.b16 %v65
    %v279 = vunpack.c.l.b16 %v66
    %v280 = vunpack.c.l.b16 %v67
    %v281 = vunpack.c.l.b16 %v68
    %v282 = vunpack.c.l.b16 %v69
    %v283 = vunpack.c.l.b16 %v70
    %v284 = vunpack.c.l.b16 %v71
    %v285 = vunpack.c.l.b16 %v72
    %v286 = vunpack.c.l.b16 %v73
    %v287 = vunpack.c.l.b16 %v74
    %v288 = vunpack.c.l.b16 %v75
    %v289 = vpack.c.b16 %v274, %v273
    %v290 = vpack.c.b16 %v276, %v275
    %v291 = vpack.c.b16 %v278, %v277
    %v292 = vpack.c.b16 %v280, %v279
    %v293 = vpack.c.b16 %v282, %v281
    %v294 = vpack.c.b16 %v284, %v283
    %v295 = vpack.c.b16 %v286, %v285
    %v296 = vpack.c.b16 %v288, %v287
    %305 = vmatpush.bf16.msra.mxu0 %v296
    %306 = vmatpush.bf16.msra.mxu0 %v295
    %307 = vmatpush.bf16.msra.mxu0 %v294
    %308 = vmatpush.bf16.msra.mxu0 %v293
    %309 = vmatpush.bf16.msra.mxu0 %v292
    %310 = vmatpush.bf16.msra.mxu0 %v291
    %311 = vmatpush.bf16.msra.mxu0 %v290
    %312 = vmatpush.bf16.msra.mxu0 %v289
    %313 = vmatmul.bf16.gmra.mxu0 %v256
    %v314 = vpop.f32.mrf.mxu0
    %v315 = vadd.f32 0.0, %v314
    %v316 = vpop.f32.mrf.mxu0
    %v317 = vadd.f32 0.0, %v316
    %318 = vdwg.mxu0
    %321 = vrot.lane.b32.xlu0 %v315, 32
    %v322 = vpop.permute.xlu0 %321
    %323 = vrot.lane.b32.xlu0 %v317, 32
    %v324 = vpop.permute.xlu0 %323
    %v327 = vadd.f32 %v34, %v322
    %v328 = vadd.f32 %v35, %v324
    %v330 = vperm.slane %v79, 0
    %331 = vrot.lane.b32.xlu0 %v330, 32
    %v332 = vpop.permute.xlu0 %331
    %v334 = vadd.f32 %v327, %v332
    %v335 = vadd.f32 %v328, %v332
    %336 = vst.msk [vmem:[#allocation2] sm:$0xff] %vm99, %v203
    %337 = vst.msk [vmem:[#allocation2 + $0x8] sm:$0xff] %vm99, %v204
    %vm338 = vcmask 523520
    %339 = vst.msk [vmem:[#allocation2] sm:$0xff] %vm338, %v334
    %340 = vst.msk [vmem:[#allocation2 + $0x8] sm:$0xff] %vm338, %v335
    // Predicated region
    $region38: #{tpu_custom_call.1} parent=1 // pred_check
      _
    $region39: #{tpu_custom_call.1} parent=1 // pred_check_branch
      %342 = sbr.rel (0) target = $region41
    $region40: #{tpu_custom_call.1} parent=1 // pred_region
      %344 = vsyncadd [#allocation3], 0
      %s345 = sshll.u32 [#allocation2], 4
      %s346 = int_to_ptr.vmem [resolvable:$true] %s345
      %s347 = sshll.u32 %s9, 4
      %s348 = int_to_ptr.hbm [resolvable:$true] %s347
      %353 = dma.vmem_to_hbm [thread:$0]  %s346, 256, %s348, [#allocation3], 128, 128, 8
    $region41: #{tpu_custom_call.1} parent=1 // pred_fallthru
      _
    // Predicated region
    $region42: #{tpu_custom_call.1} parent=1 // pred_check
      _
    $region43: #{tpu_custom_call.1} parent=1 // pred_check_branch
      %355 = sbr.rel (0) target = $region45
    $region44: #{tpu_custom_call.1} parent=1 // pred_region
      %357 = dma.done [#allocation3], 256
    $region45: #{tpu_custom_call.1} parent=1 // pred_fallthru
      _
    %358 = vsyncpa [#allocation3], 1

</llo_original>
